<compile_context>
chip_gen: v6e
topology: v6e:2x2x1
jax: 0.10.0
libtpu: 0.0.40
codegen_flags: <defaults>
</compile_context>

<pallas_src>
import functools

import jax
import jax.numpy as jnp
import numpy as np
from jax.experimental import pallas as pl
from jax.experimental.pallas import tpu as pltpu

LN_EPS = 1e-5


def _round_up(x, m):
    return (x + m - 1) // m * m


def _vmem_capacity_bytes():
    """Physical VMEM of the local TPU generation (v5e/v6e: 128 MiB, v7x: 64 MiB)."""
    try:
        cap = int(pltpu.get_tpu_info().vmem_capacity_bytes)
        if cap > 0:
            return cap
    except Exception:
        pass
    return 64 * 1024 * 1024  # conservative fallback (v7x per-core)


def _channel_add_mlp(ctx, w1t_ref, b1_ref, g_ref, bt_ref, w2t_ref, b2_ref):
    """1x1 conv -> LayerNorm([P,1,1]) -> ReLU -> 1x1 conv on a (TB, C) context."""
    t = jnp.dot(ctx, w1t_ref[...], preferred_element_type=jnp.float32) + b1_ref[...]
    mu = jnp.mean(t, axis=-1, keepdims=True)
    var = jnp.mean((t - mu) * (t - mu), axis=-1, keepdims=True)   # biased, like torch
    t = (t - mu) * jax.lax.rsqrt(var + LN_EPS) * g_ref[...] + bt_ref[...]
    t = jnp.maximum(t, 0.0)
    return jnp.dot(t, w2t_ref[...], preferred_element_type=jnp.float32) + b2_ref[...]


# --------------------------------------------------------------------------- #
# Single-pass kernel: whole (TB, C, HW) plane resident in VMEM.
# --------------------------------------------------------------------------- #
def _context_block_kernel(x_ref,     # (TB, C, S)  input (native dtype, S = H*W)
                          wm_ref,    # (1, C)      conv_mask weight
                          bm_ref,    # (1,) SMEM   conv_mask bias
                          w1t_ref,   # (C, P)
                          b1_ref,    # (1, P)
                          g_ref,     # (1, P)      LayerNorm gamma
                          bt_ref,    # (1, P)      LayerNorm beta
                          w2t_ref,   # (P, C)
                          b2_ref,    # (1, C)
                          o_ref):    # (TB, C, S)
    x = x_ref[...]                                     # native dtype, no f32 copy
    wm = wm_ref[...].astype(x.dtype)                   # (1, C)

    # logits[b, s] = sum_c wm[c] * x[b, c, s]: ONE wide MXU matmul (K=C, N=TB*S).
    logits = jax.lax.dot_general(
        wm, x, dimension_numbers=(((1,), (1,)), ((), ())),
        preferred_element_type=jnp.float32)[0]          # (TB, S) f32
    logits = logits + bm_ref[0]

    m = jnp.max(logits, axis=-1, keepdims=True)
    e = jnp.exp(logits - m)
    denom = jnp.sum(e, axis=-1, keepdims=True)
    r = pl.reciprocal(denom, approx=True)               # EUP slot
    r = r * (2.0 - denom * r)                           # Newton step -> ~f32 exact
    attn = (e * r).astype(x.dtype)                      # (TB, S)

    # context[b, c] = sum_s x[b, c, s] * attn[b, s]  (batched MXU matmul).
    ctx = jax.lax.dot_general(
        x, attn, dimension_numbers=(((2,), (1,)), ((0,), (0,))),
        preferred_element_type=jnp.float32)              # (TB, C) f32

    add = _channel_add_mlp(ctx, w1t_ref, b1_ref, g_ref, bt_ref, w2t_ref, b2_ref)

    # Fusion: out = x + channel_add_term, kept in the native dtype.
    o_ref[...] = (x + add.astype(x.dtype)[:, :, None]).astype(o_ref.dtype)


# --------------------------------------------------------------------------- #
# Streaming fallback: spatial tiling + online softmax, emits only (B, C) add.
# --------------------------------------------------------------------------- #
def _streaming_pool_kernel(hw, ts,
                           x_ref,     # (1, C, ts)
                           wm_ref, bm_ref, w1t_ref, b1_ref, g_ref, bt_ref,
                           w2t_ref, b2_ref,
                           add_ref,   # (1, C) f32
                           m_sc, d_sc, ctx_sc):
    s = pl.program_id(1)
    ns = pl.num_programs(1)

    @pl.when(s == 0)
    def _():
        m_sc[...] = jnp.full(m_sc.shape, -jnp.inf, dtype=m_sc.dtype)
        d_sc[...] = jnp.zeros(d_sc.shape, d_sc.dtype)
        ctx_sc[...] = jnp.zeros(ctx_sc.shape, ctx_sc.dtype)

    x = x_ref[...]                                       # (1, C, ts) native dtype
    ragged = (hw % ts) != 0
    if ragged:
        # Zero out-of-range lanes of the last partial tile so garbage never
        # reaches the MXU contraction.
        lane3 = jax.lax.broadcasted_iota(jnp.int32, (1, 1, ts), 2) + s * ts
        x = jnp.where(lane3 < hw, x, jnp.zeros_like(x))

    wm = wm_ref[...].astype(x.dtype)                     # (1, C)
    logits = jax.lax.dot_general(
        wm, x, dimension_numbers=(((1,), (1,)), ((), ())),
        preferred_element_type=jnp.float32)[0]           # (1, ts)
    logits = logits + bm_ref[0]
    if ragged:
        lane2 = jax.lax.broadcasted_iota(jnp.int32, (1, ts), 1) + s * ts
        logits = jnp.where(lane2 < hw, logits, -jnp.inf)

    m_prev = m_sc[...]                                    # (1, 1)
    m_new = jnp.maximum(m_prev, jnp.max(logits, axis=-1, keepdims=True))
    scale = jnp.exp(m_prev - m_new)                       # (1, 1)
    e = jnp.exp(logits - m_new)                           # (1, ts)
    d_sc[...] = d_sc[...] * scale + jnp.sum(e, axis=-1, keepdims=True)
    pe = jax.lax.dot_general(                             # sum_s x[:, :, s] * e[:, s]
        x, e.astype(x.dtype), dimension_numbers=(((2,), (1,)), ((0,), (0,))),
        preferred_element_type=jnp.float32)               # (1, C)
    ctx_sc[...] = ctx_sc[...] * scale + pe
    m_sc[...] = m_new

    @pl.when(s == ns - 1)
    def _():
        denom = d_sc[...]
        r = pl.reciprocal(denom, approx=True)
        r = r * (2.0 - denom * r)
        ctx = ctx_sc[...] * r                             # (1, C)
        add = _channel_add_mlp(ctx, w1t_ref, b1_ref, g_ref, bt_ref, w2t_ref, b2_ref)
        add_ref[...] = add.astype(add_ref.dtype)


# --------------------------------------------------------------------------- #
# Wrapper
# --------------------------------------------------------------------------- #
def context_block(x, params, *, vmem_budget_bytes=None, batch_tile=None,
                  spatial_tile=None, force_streaming=False):
    """Forward of GCNet ContextBlock (pooling='att', fusion=('channel_add',)).

    x: (B, C, H, W) -> (B, C, H, W).
    """
    B, C, H, W = x.shape
    HW = H * W
    P = params["w1t"].shape[1]
    itemsize = jnp.dtype(x.dtype).itemsize
    x_flat = x.reshape(B, C, HW)                          # free reshape, no pad

    if vmem_budget_bytes is None:
        # ~75% of physical VMEM: 48 MiB on v7x, 96 MiB on v5e/v6e.
        vmem_budget_bytes = int(0.75 * _vmem_capacity_bytes())

    weight_bytes = sum(
        int(np.prod(v.shape)) * jnp.dtype(v.dtype).itemsize
        for k, v in params.items() if k != "bm")
    # Weight blocks are still double-buffered by the pipeline; + Mosaic scratch margin.
    fixed_overhead = 2 * weight_bytes + 4 * 1024 * 1024

    per_img = C * HW * itemsize                           # one (C, HW) plane
    per_img_tmp = 4 * HW * 4                              # f32 logits/exp/attn temps
    tb_budget = (vmem_budget_bytes - fixed_overhead) // (4 * per_img + per_img_tmp)

    if tb_budget >= 1 and not force_streaming:
        # ---------------- single-pass path ----------------
        # Target >= 8 grid steps (>= 4 per TensorCore on a 2-core v7x chip) so
        # the input DMA / output writeback of this HBM-bound kernel stay hidden.
        target_steps = 8
        tb_cap = int(max(1, min(tb_budget, max(1, B // target_steps))))
        if batch_tile is not None:
            tb_cap = int(max(1, min(tb_cap, batch_tile)))
        tb = 1
        for d in range(tb_cap, 0, -1):                    # largest divisor of B
            if B % d == 0:
                tb = d
                break
        grid = (B // tb,)
        needed = 4 * tb * per_img + tb * per_img_tmp + fixed_overhead
        vmem_limit = int(max(min(vmem_budget_bytes, needed), 8 * 1024 * 1024))

        def const(shape):
            return pl.BlockSpec(shape, lambda i: tuple(0 for _ in shape))

        out = pl.pallas_call(
            _context_block_kernel,
            out_shape=jax.ShapeDtypeStruct((B, C, HW), x.dtype),
            grid_spec=pltpu.PrefetchScalarGridSpec(
                num_scalar_prefetch=0,
                grid=grid,
                in_specs=[
                    pl.BlockSpec((tb, C, HW), lambda i: (i, 0, 0)),      # x
                    const((1, C)),                                       # conv_mask W
                    pl.BlockSpec(memory_space=pltpu.MemorySpace.SMEM),   # conv_mask b
                    const((C, P)),                                       # W1^T
                    const((1, P)),                                       # b1
                    const((1, P)),                                       # gamma
                    const((1, P)),                                       # beta
                    const((P, C)),                                       # W2^T
                    const((1, C)),                                       # b2
                ],
                out_specs=pl.BlockSpec((tb, C, HW), lambda i: (i, 0, 0)),
            ),
            compiler_params=pltpu.CompilerParams(
                dimension_semantics=("parallel",),
                vmem_limit_bytes=vmem_limit),
        )(x_flat, params["wm"], params["bm"], params["w1t"], params["b1"],
          params["gamma"], params["beta"], params["w2t"], params["b2"])
        return out.reshape(B, C, H, W)

    # ---------------- streaming fallback (large C*HW, e.g. v7x) ----------------
    if spatial_tile is not None:
        ts = int(spatial_tile)
    else:
        lane_bytes = 4 * C * itemsize + 16                # x tile (2x buffered) + temps
        ts = int((vmem_budget_bytes - fixed_overhead) // lane_bytes) // 128 * 128
        ts = max(128, ts)
    ts = min(ts, max(128, _round_up(HW, 128)))
    n_s = -(-HW // ts)
    needed_s = 4 * C * ts * itemsize + 8 * ts + fixed_overhead
    vmem_limit_s = int(max(needed_s, 8 * 1024 * 1024))

    def const2(shape):
        return pl.BlockSpec(shape, lambda b, s: tuple(0 for _ in shape))

    add = pl.pallas_call(
        functools.partial(_streaming_pool_kernel, HW, ts),
        out_shape=jax.ShapeDtypeStruct((B, C), jnp.float32),
        grid_spec=pltpu.PrefetchScalarGridSpec(
            num_scalar_prefetch=0,
            grid=(B, n_s),
            in_specs=[
                pl.BlockSpec((1, C, ts), lambda b, s: (b, 0, s)),        # x tile
                const2((1, C)),
                pl.BlockSpec(memory_space=pltpu.MemorySpace.SMEM),
                const2((C, P)), const2((1, P)), const2((1, P)), const2((1, P)),
                const2((P, C)), const2((1, C)),
            ],
            out_specs=pl.BlockSpec((1, C), lambda b, s: (b, 0)),
            scratch_shapes=[pltpu.VMEM((1, 1), jnp.float32),   # running max
                            pltpu.VMEM((1, 1), jnp.float32),   # running denom
                            pltpu.VMEM((1, C), jnp.float32)],  # running context
        ),
        compiler_params=pltpu.CompilerParams(
            dimension_semantics=("parallel", "arbitrary"),
            vmem_limit_bytes=vmem_limit_s),
    )(x_flat, params["wm"], params["bm"], params["w1t"], params["b1"],
      params["gamma"], params["beta"], params["w2t"], params["b2"])

    # TODO(synk): in the streaming path the broadcast `x + add` stays a plain XLA
    # elementwise op (memory-bound, already at roofline) instead of a 2nd Pallas pass.
    out = (x_flat + add[:, :, None]).astype(x.dtype)
    return out.reshape(B, C, H, W)


# --------------------------------------------------------------------------- #
# Reference + params
# --------------------------------------------------------------------------- #
def context_block_ref_np(x, params):
    """Float64 NumPy reference mirroring the PyTorch forward."""
    x = np.asarray(x, np.float64)
    B, C, H, W = x.shape
    S = H * W
    xf = x.reshape(B, C, S)
    wm = np.asarray(params["wm"], np.float64)[0]
    bm = float(np.asarray(params["bm"])[0])
    logits = np.einsum("bcs,c->bs", xf, wm) + bm
    logits = logits - logits.max(axis=-1, keepdims=True)
    e = np.exp(logits)
    attn = e / e.sum(axis=-1, keepdims=True)
    ctx = np.einsum("bcs,bs->bc", xf, attn)
    t = ctx @ np.asarray(params["w1t"], np.float64) + np.asarray(params["b1"], np.float64)[0]
    mu = t.mean(-1, keepdims=True)
    var = ((t - mu) ** 2).mean(-1, keepdims=True)
    t = (t - mu) / np.sqrt(var + LN_EPS) \
        * np.asarray(params["gamma"], np.float64)[0] + np.asarray(params["beta"], np.float64)[0]
    t = np.maximum(t, 0.0)
    add = t @ np.asarray(params["w2t"], np.float64) + np.asarray(params["b2"], np.float64)[0]
    return x + add[:, :, None, None]


def make_params(key, inplanes, ratio):
    planes = max(1, int(inplanes * ratio))
    ks = jax.random.split(key, 6)
    f32 = jnp.float32
    # NOTE: the real module zero-inits the last conv (last_zero_init), which would
    # make the output trivially equal to the input; small random weights are used
    # instead so the whole compute path is exercised.
    return {
        "wm":    jax.random.normal(ks[0], (1, inplanes), f32) * 0.1,   # conv_mask weight
        "bm":    jax.random.normal(ks[1], (1,), f32) * 0.1,            # conv_mask bias (SMEM)
        "w1t":   jax.random.normal(ks[2], (inplanes, planes), f32) * 0.1,
        "b1":    jax.random.normal(ks[3], (1, planes), f32) * 0.1,
        "gamma": jnp.ones((1, planes), f32),
        "beta":  jnp.zeros((1, planes), f32),
        "w2t":   jax.random.normal(ks[4], (planes, inplanes), f32) * 0.1,
        "b2":    jax.random.normal(ks[5], (1, inplanes), f32) * 0.1,
    }


if __name__ == "__main__":
    key = jax.random.PRNGKey(0)
    k1, k2, k3, k4, k5 = jax.random.split(key, 5)

    # Case 1: HW = 256 (multiple of 128), single-pass path.
    B, C, H, W = 2, 16, 16, 16              # inplanes=16, ratio=0.25 -> planes=4
    x = jax.random.normal(k1, (B, C, H, W), jnp.float32)
    params = make_params(k2, C, ratio=0.25)
    out = jax.block_until_ready(context_block(x, params))
    np.testing.assert_allclose(np.asarray(out), context_block_ref_np(x, params),
                               rtol=1e-4, atol=1e-4)

    # Case 2: HW = 49 (ragged, not a multiple of 128), single-pass path with a
    # full-extent spatial block -> no wrapper-side pad / output-slice passes.
    B2, C2, H2, W2 = 3, 8, 7, 7             # inplanes=8, ratio=0.5 -> planes=4
    x2 = jax.random.normal(k3, (B2, C2, H2, W2), jnp.float32)
    params2 = make_params(k4, C2, ratio=0.5)
    out2 = jax.block_until_ready(context_block(x2, params2))
    np.testing.assert_allclose(np.asarray(out2), context_block_ref_np(x2, params2),
                               rtol=1e-4, atol=1e-4)

    # Case 3: force the streaming (spatially tiled, online-softmax) fallback,
    # including a ragged last spatial tile (HW = 400, tile = 128).
    B3, C3, H3, W3 = 2, 8, 20, 20
    x3 = jax.random.normal(k5, (B3, C3, H3, W3), jnp.float32)
    params3 = make_params(k4, C3, ratio=0.5)
    out3 = jax.block_until_ready(
        context_block(x3, params3, force_streaming=True, spatial_tile=128))
    np.testing.assert_allclose(np.asarray(out3), context_block_ref_np(x3, params3),
                               rtol=1e-4, atol=1e-4)

    print("KERNEL_OK")
</pallas_src>

<mosaic_0001>
module attributes {stable_mosaic.version = 11 : i64} {
  func.func @_context_block_kernel(%arg0: i32, %arg1: memref<1x16x256xf32, #tpu.memory_space<vmem>>, %arg2: memref<1x16xf32, #tpu.memory_space<vmem>>, %arg3: memref<1xf32, #tpu.memory_space<smem>>, %arg4: memref<16x4xf32, #tpu.memory_space<vmem>>, %arg5: memref<1x4xf32, #tpu.memory_space<vmem>>, %arg6: memref<1x4xf32, #tpu.memory_space<vmem>>, %arg7: memref<1x4xf32, #tpu.memory_space<vmem>>, %arg8: memref<4x16xf32, #tpu.memory_space<vmem>>, %arg9: memref<1x16xf32, #tpu.memory_space<vmem>>, %arg10: memref<1x16x256xf32, #tpu.memory_space<vmem>>) attributes {dimension_semantics = [#tpu.dimension_semantics<parallel>], iteration_bounds = array<i64: 2>, scalar_prefetch = 0 : i64, scratch_operands = 0 : i64, tpu.core_type = #tpu.core_type<tc>, window_params = [{transform_indices = @transform_0, window_bounds = array<i64: 1, 16, 256>}, {pipeline_mode = #tpu.pipeline_mode<synchronous>, transform_indices = @transform_1, window_bounds = array<i64: 1, 16>}, {transform_indices = @transform_2, window_bounds = array<i64: 1>}, {pipeline_mode = #tpu.pipeline_mode<synchronous>, transform_indices = @transform_3, window_bounds = array<i64: 16, 4>}, {pipeline_mode = #tpu.pipeline_mode<synchronous>, transform_indices = @transform_4, window_bounds = array<i64: 1, 4>}, {pipeline_mode = #tpu.pipeline_mode<synchronous>, transform_indices = @transform_5, window_bounds = array<i64: 1, 4>}, {pipeline_mode = #tpu.pipeline_mode<synchronous>, transform_indices = @transform_6, window_bounds = array<i64: 1, 4>}, {pipeline_mode = #tpu.pipeline_mode<synchronous>, transform_indices = @transform_7, window_bounds = array<i64: 4, 16>}, {pipeline_mode = #tpu.pipeline_mode<synchronous>, transform_indices = @transform_8, window_bounds = array<i64: 1, 16>}, {transform_indices = @transform_9, window_bounds = array<i64: 1, 16, 256>}]} {
    %c0 = arith.constant 0 : index
    %c0_0 = arith.constant 0 : index
    %c0_1 = arith.constant 0 : index
    %0 = vector.load %arg1[%c0, %c0_0, %c0_1] : memref<1x16x256xf32, #tpu.memory_space<vmem>>, vector<1x16x256xf32>
    %c0_2 = arith.constant 0 : index
    %c0_3 = arith.constant 0 : index
    %1 = vector.load %arg2[%c0_2, %c0_3] : memref<1x16xf32, #tpu.memory_space<vmem>>, vector<1x16xf32>
    %cst = arith.constant dense<0.000000e+00> : vector<1x1x256xf32>
    %2 = tpu.matmul %1, %0, %cst {dimension_numbers = #tpu.dot_dimension_numbers<[1], [1], [0], [0, 2], [0, 0, 1, 0, 1, 2], [], []>} : vector<1x16xf32>, vector<1x16x256xf32>, vector<1x1x256xf32> -> vector<1x1x256xf32>
    %3 = vector.shape_cast %2 : vector<1x1x256xf32> to vector<1x256xf32>
    %c0_4 = arith.constant 0 : index
    %4 = memref.load %arg3[%c0_4] : memref<1xf32, #tpu.memory_space<smem>>
    %5 = vector.broadcast %4 : f32 to vector<1x256xf32>
    %6 = arith.addf %3, %5 : vector<1x256xf32>
    %cst_5 = arith.constant dense<0xFF800000> : vector<1xf32>
    %7 = vector.multi_reduction <maximumf>, %6, %cst_5 [1] : vector<1x256xf32> to vector<1xf32>
    %8 = vector.shape_cast %7 : vector<1xf32> to vector<1x1xf32>
    %9 = vector.broadcast %8 : vector<1x1xf32> to vector<1x256xf32>
    %10 = arith.subf %6, %9 : vector<1x256xf32>
    %11 = math.exp %10 : vector<1x256xf32>
    %cst_6 = arith.constant dense<0.000000e+00> : vector<1xf32>
    %12 = vector.multi_reduction <add>, %11, %cst_6 [1] : vector<1x256xf32> to vector<1xf32>
    %13 = vector.shape_cast %12 : vector<1xf32> to vector<1x1xf32>
    %14 = tpu.reciprocal %13 {approx = true} : vector<1x1xf32> -> vector<1x1xf32>
    %15 = arith.mulf %13, %14 : vector<1x1xf32>
    %cst_7 = arith.constant 2.000000e+00 : f32
    %16 = vector.broadcast %cst_7 : f32 to vector<1x1xf32>
    %17 = arith.subf %16, %15 : vector<1x1xf32>
    %18 = arith.mulf %14, %17 : vector<1x1xf32>
    %19 = vector.broadcast %18 : vector<1x1xf32> to vector<1x256xf32>
    %20 = arith.mulf %11, %19 : vector<1x256xf32>
    %cst_8 = arith.constant dense<0.000000e+00> : vector<1x16xf32>
    %21 = tpu.matmul %0, %20, %cst_8 {dimension_numbers = #tpu.dot_dimension_numbers<[2], [1], [1], [], [0, 0, 0, 1], [0], [0]>} : vector<1x16x256xf32>, vector<1x256xf32>, vector<1x16xf32> -> vector<1x16xf32>
    %c0_9 = arith.constant 0 : index
    %c0_10 = arith.constant 0 : index
    %22 = vector.load %arg4[%c0_9, %c0_10] : memref<16x4xf32, #tpu.memory_space<vmem>>, vector<16x4xf32>
    %cst_11 = arith.constant dense<0.000000e+00> : vector<1x4xf32>
    %23 = tpu.matmul %21, %22, %cst_11 {dimension_numbers = #tpu.dot_dimension_numbers<[1], [0], [0], [1], [0, 0, 1, 1], [], []>} : vector<1x16xf32>, vector<16x4xf32>, vector<1x4xf32> -> vector<1x4xf32>
    %c0_12 = arith.constant 0 : index
    %c0_13 = arith.constant 0 : index
    %24 = vector.load %arg5[%c0_12, %c0_13] : memref<1x4xf32, #tpu.memory_space<vmem>>, vector<1x4xf32>
    %25 = arith.addf %23, %24 : vector<1x4xf32>
    %cst_14 = arith.constant dense<0.000000e+00> : vector<1xf32>
    %26 = vector.multi_reduction <add>, %25, %cst_14 [1] : vector<1x4xf32> to vector<1xf32>
    %27 = vector.shape_cast %26 : vector<1xf32> to vector<1x1xf32>
    %cst_15 = arith.constant 4.000000e+00 : f32
    %28 = vector.broadcast %cst_15 : f32 to vector<1x1xf32>
    %29 = arith.divf %27, %28 : vector<1x1xf32>
    %30 = vector.broadcast %29 : vector<1x1xf32> to vector<1x4xf32>
    %31 = arith.subf %25, %30 : vector<1x4xf32>
    %32 = vector.broadcast %29 : vector<1x1xf32> to vector<1x4xf32>
    %33 = arith.subf %25, %32 : vector<1x4xf32>
    %34 = arith.mulf %31, %33 : vector<1x4xf32>
    %cst_16 = arith.constant dense<0.000000e+00> : vector<1xf32>
    %35 = vector.multi_reduction <add>, %34, %cst_16 [1] : vector<1x4xf32> to vector<1xf32>
    %36 = vector.shape_cast %35 : vector<1xf32> to vector<1x1xf32>
    %cst_17 = arith.constant 4.000000e+00 : f32
    %37 = vector.broadcast %cst_17 : f32 to vector<1x1xf32>
    %38 = arith.divf %36, %37 : vector<1x1xf32>
    %39 = vector.broadcast %29 : vector<1x1xf32> to vector<1x4xf32>
    %40 = arith.subf %25, %39 : vector<1x4xf32>
    %cst_18 = arith.constant 9.99999974E-6 : f32
    %41 = vector.broadcast %cst_18 : f32 to vector<1x1xf32>
    %42 = arith.addf %38, %41 : vector<1x1xf32>
    %43 = math.rsqrt %42 : vector<1x1xf32>
    %44 = vector.broadcast %43 : vector<1x1xf32> to vector<1x4xf32>
    %45 = arith.mulf %40, %44 : vector<1x4xf32>
    %c0_19 = arith.constant 0 : index
    %c0_20 = arith.constant 0 : index
    %46 = vector.load %arg6[%c0_19, %c0_20] : memref<1x4xf32, #tpu.memory_space<vmem>>, vector<1x4xf32>
    %47 = arith.mulf %45, %46 : vector<1x4xf32>
    %c0_21 = arith.constant 0 : index
    %c0_22 = arith.constant 0 : index
    %48 = vector.load %arg7[%c0_21, %c0_22] : memref<1x4xf32, #tpu.memory_space<vmem>>, vector<1x4xf32>
    %49 = arith.addf %47, %48 : vector<1x4xf32>
    %cst_23 = arith.constant 0.000000e+00 : f32
    %50 = vector.broadcast %cst_23 : f32 to vector<1x4xf32>
    %51 = arith.maximumf %49, %50 : vector<1x4xf32>
    %c0_24 = arith.constant 0 : index
    %c0_25 = arith.constant 0 : index
    %52 = vector.load %arg8[%c0_24, %c0_25] : memref<4x16xf32, #tpu.memory_space<vmem>>, vector<4x16xf32>
    %cst_26 = arith.constant dense<0.000000e+00> : vector<1x16xf32>
    %53 = tpu.matmul %51, %52, %cst_26 {dimension_numbers = #tpu.dot_dimension_numbers<[1], [0], [0], [1], [0, 0, 1, 1], [], []>} : vector<1x4xf32>, vector<4x16xf32>, vector<1x16xf32> -> vector<1x16xf32>
    %c0_27 = arith.constant 0 : index
    %c0_28 = arith.constant 0 : index
    %54 = vector.load %arg9[%c0_27, %c0_28] : memref<1x16xf32, #tpu.memory_space<vmem>>, vector<1x16xf32>
    %55 = arith.addf %53, %54 : vector<1x16xf32>
    %56 = vector.shape_cast %55 : vector<1x16xf32> to vector<1x16x1xf32>
    %57 = vector.broadcast %56 : vector<1x16x1xf32> to vector<1x16x256xf32>
    %58 = arith.addf %0, %57 : vector<1x16x256xf32>
    %c0_29 = arith.constant 0 : index
    %c0_30 = arith.constant 0 : index
    %c0_31 = arith.constant 0 : index
    %59 = vector.load %arg10[%c0_29, %c0_30, %c0_31] : memref<1x16x256xf32, #tpu.memory_space<vmem>>, vector<1x16x256xf32>
    tpu.vector_store %arg10[%c0_29, %c0_30, %c0_31], %58 {strides = array<i32>} : memref<1x16x256xf32, #tpu.memory_space<vmem>>, vector<1x16x256xf32>,
    return
  }
  func.func @transform_0(%arg0: i32) -> (i32, i32, i32) {
    %c0_i32 = arith.constant 0 : i32
    %c0_i32_0 = arith.constant 0 : i32
    %c0_i32_1 = arith.constant 0 : i32
    return %arg0, %c0_i32, %c0_i32_0 : i32, i32, i32
  }
  func.func @transform_1(%arg0: i32) -> (i32, i32) {
    %c0_i32 = arith.constant 0 : i32
    %c0_i32_0 = arith.constant 0 : i32
    %c0_i32_1 = arith.constant 0 : i32
    return %c0_i32, %c0_i32_0 : i32, i32
  }
  func.func @transform_2(%arg0: i32) -> i32 {
    %c0_i32 = arith.constant 0 : i32
    %c0_i32_0 = arith.constant 0 : i32
    return %c0_i32 : i32
  }
  func.func @transform_3(%arg0: i32) -> (i32, i32) {
    %c0_i32 = arith.constant 0 : i32
    %c0_i32_0 = arith.constant 0 : i32
    %c0_i32_1 = arith.constant 0 : i32
    return %c0_i32, %c0_i32_0 : i32, i32
  }
  func.func @transform_4(%arg0: i32) -> (i32, i32) {
    %c0_i32 = arith.constant 0 : i32
    %c0_i32_0 = arith.constant 0 : i32
    %c0_i32_1 = arith.constant 0 : i32
    return %c0_i32, %c0_i32_0 : i32, i32
  }
  func.func @transform_5(%arg0: i32) -> (i32, i32) {
    %c0_i32 = arith.constant 0 : i32
    %c0_i32_0 = arith.constant 0 : i32
    %c0_i32_1 = arith.constant 0 : i32
    return %c0_i32, %c0_i32_0 : i32, i32
  }
  func.func @transform_6(%arg0: i32) -> (i32, i32) {
    %c0_i32 = arith.constant 0 : i32
    %c0_i32_0 = arith.constant 0 : i32
    %c0_i32_1 = arith.constant 0 : i32
    return %c0_i32, %c0_i32_0 : i32, i32
  }
  func.func @transform_7(%arg0: i32) -> (i32, i32) {
    %c0_i32 = arith.constant 0 : i32
    %c0_i32_0 = arith.constant 0 : i32
    %c0_i32_1 = arith.constant 0 : i32
    return %c0_i32, %c0_i32_0 : i32, i32
  }
  func.func @transform_8(%arg0: i32) -> (i32, i32) {
    %c0_i32 = arith.constant 0 : i32
    %c0_i32_0 = arith.constant 0 : i32
    %c0_i32_1 = arith.constant 0 : i32
    return %c0_i32, %c0_i32_0 : i32, i32
  }
  func.func @transform_9(%arg0: i32) -> (i32, i32, i32) {
    %c0_i32 = arith.constant 0 : i32
    %c0_i32_0 = arith.constant 0 : i32
    %c0_i32_1 = arith.constant 0 : i32
    return %arg0, %c0_i32, %c0_i32_0 : i32, i32, i32
  }
}

</mosaic_0001>

<llo_original>
// kernel: tpu_custom_call.1
$region0: #{tpu_custom_call.1}
  #allocation0 [shape = 'u32[]', space=smem, size = 0x4, offset = 0x4, fixed_abs, tag = 'smem constant byte address 0x4 - core index']
  #allocation1 [shape = 'u32[144,128]{1,0:T(1,128)}', space=vmem, size = 0x12000, scoped, tag = 'internal scratch']
  #allocation2 [shape = 'f32[1]{0:T(128)S(6)}', space=smem, size = 0x200, scoped, tag = 'scoped memory for tpu_custom_call.1']
  %s0 = inlined_call_operand.hbm [shape: f32[2,16,256], index: 0, kind: input, shape index: {}]
  %s1 = inlined_call_operand.vmem [shape: f32[1,16], index: 1, kind: input, shape index: {}]
  %s2 = inlined_call_operand.<no memory space> [shape: f32[1], index: 2, kind: input, shape index: {}]
  %s3 = inlined_call_operand.vmem [shape: f32[16,4], index: 3, kind: input, shape index: {}]
  %s4 = inlined_call_operand.vmem [shape: f32[1,4], index: 4, kind: input, shape index: {}]
  %s5 = inlined_call_operand.vmem [shape: f32[1,4], index: 5, kind: input, shape index: {}]
  %s6 = inlined_call_operand.vmem [shape: f32[1,4], index: 6, kind: input, shape index: {}]
  %s7 = inlined_call_operand.vmem [shape: f32[4,16], index: 7, kind: input, shape index: {}]
  %s8 = inlined_call_operand.vmem [shape: f32[1,16], index: 8, kind: input, shape index: {}]
  %s9 = inlined_call_operand.hbm [shape: f32[2,16,256], index: 9, kind: output, shape index: {}]
  %s10 = sld [smem:[#allocation0]]
  $region73: #{tpu_custom_call.1} parent=0
    _
  %s12 = ssub.s32 1, %s10
  %s13 = scalar_select 0, %s12, %s10
  %14 = sst [smem:[#allocation2]] %s2
  $region1: #{tpu_custom_call.1} parent=0
    #allocation3 [shape = 'u8[32768]{0}', space=vmem, size = 0x8000, scoped, tag = 'input window, operand 0']
    #allocation4 [shape = 's32[2]{0}', space=sflag, size = 0x8, scoped, tag = 'scoped memory for tpu_custom_call.1']
    #allocation5 [shape = 's32[2]{0}', space=sflag, size = 0x8, scoped, tag = 'scoped memory for tpu_custom_call.1']
    #allocation6 [shape = 'u8[32768]{0}', space=vmem, size = 0x8000, scoped, tag = 'output window, operand 0']
    %15 = vsyncpa [#allocation4], 0
    %s16 = scalar_lea.sflag [#allocation4], 1
    %17 = vsyncpa %s16, 0
    %18 = vsyncpa [#allocation5], 0
    %s19 = scalar_lea.sflag [#allocation5], 1
    %20 = vsyncpa %s19, 0
    loop: start=0, step=1, limit=4
    $region2: #{tpu_custom_call.1} parent=1 // loop_pre_header
      _
    $region3: #{tpu_custom_call.1} parent=1 // loop_header
      %s22 = sphi 0, %s26
      %p23 = scmp.ge.s32.totalorder %s22, 4
      %s32 = sphi 0, %s34
      %s35 = sphi 0, %s32
      %s36 = sphi 0, %s35
      %s52 = sphi 0, %s36
      %s56 = sphi 0, %s56
      %s58 = sphi 0, %s56
      %s59 = sphi 0, %s58
      %s73 = sphi 0, %s59
      %s77 = sphi 0, %s77
      %s79 = sphi 0, %s77
      %s80 = sphi 0, %s79
      %s94 = sphi 0, %s80
      %s98 = sphi 0, %s98
      %s100 = sphi 0, %s98
      %s101 = sphi 0, %s100
      %s115 = sphi 0, %s101
      %s119 = sphi 0, %s119
      %s121 = sphi 0, %s119
      %s122 = sphi 0, %s121
      %s136 = sphi 0, %s122
      %s140 = sphi 0, %s140
      %s142 = sphi 0, %s140
      %s143 = sphi 0, %s142
      %s157 = sphi 0, %s143
      %s161 = sphi 0, %s161
      %s163 = sphi 0, %s161
      %s164 = sphi 0, %s163
      %s178 = sphi 0, %s164
      %s182 = sphi 0, %s182
      %s184 = sphi 0, %s182
      %s185 = sphi 0, %s184
      %s199 = sphi 0, %s185
      %s203 = sphi 0, %s203
      %s205 = sphi 0, %s203
      %s206 = sphi 0, %s205
      %s220 = sphi 0, %s206
      %s226 = sphi 0, %s228
      %s229 = sphi 0, %s226
      %s230 = sphi 0, %s229
      %s246 = sphi 0, %s230
    $region4: #{tpu_custom_call.1} parent=1 // loop_header_branch
      %25 = sbr.rel (%p23) target = $region8
    $region5: #{tpu_custom_call.1} parent=1 // loop_body
      %s27 = ssub.s32 %s22, 1
      %s28 = ssub.s32 %s22, 2
      %s29 = sadd.s32 %s22, 1
      %s30 = ssub.s32 %s22, %s29
      %p31 = scmp.eq.s32.totalorder %s30, 0
      %s33 = sadd.s32 %s32, 1
      %s34 = scalar_select %p31, %s32, %s33
      %p37 = pneg %p31
      %p38 = scmp.eq.s32.totalorder %s22, 1
      %p39 = por %p37, %p38
      %p40 = scmp.ne.s32.totalorder %s32, %s35
      %p41 = scmp.eq.s32.totalorder %s22, 0
      %p42 = por %p40, %p41
      %p43 = scmp.ne.s32.totalorder %s32, %s35
      %p44 = scmp.eq.s32.totalorder %s27, 1
      %p45 = por %p43, %p44
      %p46 = scmp.ne.s32.totalorder %s35, %s36
      %p47 = scmp.eq.s32.totalorder %s27, 0
      %p48 = por %p46, %p47
      %p49 = scmp.ne.s32.totalorder %s35, %s36
      %p50 = scmp.eq.s32.totalorder %s28, 1
      %p51 = por %p49, %p50
      %p53 = scmp.ne.s32.totalorder %s36, %s52
      %p54 = scmp.eq.s32.totalorder %s28, 0
      %p55 = por %p53, %p54
      %s57 = sadd.s32 %s56, 1
      %p60 = scmp.eq.s32.totalorder %s22, 1
      %p61 = scmp.ne.s32.totalorder %s56, %s58
      %p62 = scmp.eq.s32.totalorder %s22, 0
      %p63 = por %p61, %p62
      %p64 = scmp.ne.s32.totalorder %s56, %s58
      %p65 = scmp.eq.s32.totalorder %s27, 1
      %p66 = por %p64, %p65
      %p67 = scmp.ne.s32.totalorder %s58, %s59
      %p68 = scmp.eq.s32.totalorder %s27, 0
      %p69 = por %p67, %p68
      %p70 = scmp.ne.s32.totalorder %s58, %s59
      %p71 = scmp.eq.s32.totalorder %s28, 1
      %p72 = por %p70, %p71
      %p74 = scmp.ne.s32.totalorder %s59, %s73
      %p75 = scmp.eq.s32.totalorder %s28, 0
      %p76 = por %p74, %p75
      %s78 = sadd.s32 %s77, 1
      %p81 = scmp.eq.s32.totalorder %s22, 1
      %p82 = scmp.ne.s32.totalorder %s77, %s79
      %p83 = scmp.eq.s32.totalorder %s22, 0
      %p84 = por %p82, %p83
      %p85 = scmp.ne.s32.totalorder %s77, %s79
      %p86 = scmp.eq.s32.totalorder %s27, 1
      %p87 = por %p85, %p86
      %p88 = scmp.ne.s32.totalorder %s79, %s80
      %p89 = scmp.eq.s32.totalorder %s27, 0
      %p90 = por %p88, %p89
      %p91 = scmp.ne.s32.totalorder %s79, %s80
      %p92 = scmp.eq.s32.totalorder %s28, 1
      %p93 = por %p91, %p92
      %p95 = scmp.ne.s32.totalorder %s80, %s94
      %p96 = scmp.eq.s32.totalorder %s28, 0
      %p97 = por %p95, %p96
      %s99 = sadd.s32 %s98, 1
      %p102 = scmp.eq.s32.totalorder %s22, 1
      %p103 = scmp.ne.s32.totalorder %s98, %s100
      %p104 = scmp.eq.s32.totalorder %s22, 0
      %p105 = por %p103, %p104
      %p106 = scmp.ne.s32.totalorder %s98, %s100
      %p107 = scmp.eq.s32.totalorder %s27, 1
      %p108 = por %p106, %p107
      %p109 = scmp.ne.s32.totalorder %s100, %s101
      %p110 = scmp.eq.s32.totalorder %s27, 0
      %p111 = por %p109, %p110
      %p112 = scmp.ne.s32.totalorder %s100, %s101
      %p113 = scmp.eq.s32.totalorder %s28, 1
      %p114 = por %p112, %p113
      %p116 = scmp.ne.s32.totalorder %s101, %s115
      %p117 = scmp.eq.s32.totalorder %s28, 0
      %p118 = por %p116, %p117
      %s120 = sadd.s32 %s119, 1
      %p123 = scmp.eq.s32.totalorder %s22, 1
      %p124 = scmp.ne.s32.totalorder %s119, %s121
      %p125 = scmp.eq.s32.totalorder %s22, 0
      %p126 = por %p124, %p125
      %p127 = scmp.ne.s32.totalorder %s119, %s121
      %p128 = scmp.eq.s32.totalorder %s27, 1
      %p129 = por %p127, %p128
      %p130 = scmp.ne.s32.totalorder %s121, %s122
      %p131 = scmp.eq.s32.totalorder %s27, 0
      %p132 = por %p130, %p131
      %p133 = scmp.ne.s32.totalorder %s121, %s122
      %p134 = scmp.eq.s32.totalorder %s28, 1
      %p135 = por %p133, %p134
      %p137 = scmp.ne.s32.totalorder %s122, %s136
      %p138 = scmp.eq.s32.totalorder %s28, 0
      %p139 = por %p137, %p138
      %s141 = sadd.s32 %s140, 1
      %p144 = scmp.eq.s32.totalorder %s22, 1
      %p145 = scmp.ne.s32.totalorder %s140, %s142
      %p146 = scmp.eq.s32.totalorder %s22, 0
      %p147 = por %p145, %p146
      %p148 = scmp.ne.s32.totalorder %s140, %s142
      %p149 = scmp.eq.s32.totalorder %s27, 1
      %p150 = por %p148, %p149
      %p151 = scmp.ne.s32.totalorder %s142, %s143
      %p152 = scmp.eq.s32.totalorder %s27, 0
      %p153 = por %p151, %p152
      %p154 = scmp.ne.s32.totalorder %s142, %s143
      %p155 = scmp.eq.s32.totalorder %s28, 1
      %p156 = por %p154, %p155
      %p158 = scmp.ne.s32.totalorder %s143, %s157
      %p159 = scmp.eq.s32.totalorder %s28, 0
      %p160 = por %p158, %p159
      %s162 = sadd.s32 %s161, 1
      %p165 = scmp.eq.s32.totalorder %s22, 1
      %p166 = scmp.ne.s32.totalorder %s161, %s163
      %p167 = scmp.eq.s32.totalorder %s22, 0
      %p168 = por %p166, %p167
      %p169 = scmp.ne.s32.totalorder %s161, %s163
      %p170 = scmp.eq.s32.totalorder %s27, 1
      %p171 = por %p169, %p170
      %p172 = scmp.ne.s32.totalorder %s163, %s164
      %p173 = scmp.eq.s32.totalorder %s27, 0
      %p174 = por %p172, %p173
      %p175 = scmp.ne.s32.totalorder %s163, %s164
      %p176 = scmp.eq.s32.totalorder %s28, 1
      %p177 = por %p175, %p176
      %p179 = scmp.ne.s32.totalorder %s164, %s178
      %p180 = scmp.eq.s32.totalorder %s28, 0
      %p181 = por %p179, %p180
      %s183 = sadd.s32 %s182, 1
      %p186 = scmp.eq.s32.totalorder %s22, 1
      %p187 = scmp.ne.s32.totalorder %s182, %s184
      %p188 = scmp.eq.s32.totalorder %s22, 0
      %p189 = por %p187, %p188
      %p190 = scmp.ne.s32.totalorder %s182, %s184
      %p191 = scmp.eq.s32.totalorder %s27, 1
      %p192 = por %p190, %p191
      %p193 = scmp.ne.s32.totalorder %s184, %s185
      %p194 = scmp.eq.s32.totalorder %s27, 0
      %p195 = por %p193, %p194
      %p196 = scmp.ne.s32.totalorder %s184, %s185
      %p197 = scmp.eq.s32.totalorder %s28, 1
      %p198 = por %p196, %p197
      %p200 = scmp.ne.s32.totalorder %s185, %s199
      %p201 = scmp.eq.s32.totalorder %s28, 0
      %p202 = por %p200, %p201
      %s204 = sadd.s32 %s203, 1
      %p207 = scmp.eq.s32.totalorder %s22, 1
      %p208 = scmp.ne.s32.totalorder %s203, %s205
      %p209 = scmp.eq.s32.totalorder %s22, 0
      %p210 = por %p208, %p209
      %p211 = scmp.ne.s32.totalorder %s203, %s205
      %p212 = scmp.eq.s32.totalorder %s27, 1
      %p213 = por %p211, %p212
      %p214 = scmp.ne.s32.totalorder %s205, %s206
      %p215 = scmp.eq.s32.totalorder %s27, 0
      %p216 = por %p214, %p215
      %p217 = scmp.ne.s32.totalorder %s205, %s206
      %p218 = scmp.eq.s32.totalorder %s28, 1
      %p219 = por %p217, %p218
      %p221 = scmp.ne.s32.totalorder %s206, %s220
      %p222 = scmp.eq.s32.totalorder %s28, 0
      %p223 = por %p221, %p222
      %s224 = ssub.s32 %s22, %s29
      %p225 = scmp.eq.s32.totalorder %s224, 0
      %s227 = sadd.s32 %s226, 1
      %s228 = scalar_select %p225, %s226, %s227
      %p231 = pneg %p225
      %p232 = scmp.eq.s32.totalorder %s22, 1
      %p233 = por %p231, %p232
      %p234 = scmp.ne.s32.totalorder %s226, %s229
      %p235 = scmp.eq.s32.totalorder %s22, 0
      %p236 = por %p234, %p235
      %p237 = scmp.ne.s32.totalorder %s226, %s229
      %p238 = scmp.eq.s32.totalorder %s27, 1
      %p239 = por %p237, %p238
      %p240 = scmp.ne.s32.totalorder %s229, %s230
      %p241 = scmp.eq.s32.totalorder %s27, 0
      %p242 = por %p240, %p241
      %p243 = scmp.ne.s32.totalorder %s229, %s230
      %p244 = scmp.eq.s32.totalorder %s28, 1
      %p245 = por %p243, %p244
      %p247 = scmp.ne.s32.totalorder %s230, %s246
      %p248 = scmp.eq.s32.totalorder %s28, 0
      %p249 = por %p247, %p248
      %p250 = scmp.le.s32.totalorder 1, %s22
      %p251 = scmp.lt.s32.totalorder %s22, 3
      %p252 = pnand %p250, %p251
      %p253 = pneg %p252
      // Predicated region
      $region9: #{tpu_custom_call.1} parent=5 // pred_check
        _
      $region10: #{tpu_custom_call.1} parent=5 // pred_check_branch
        %255 = sbr.rel (%p252) target = $region12
      $region11: #{tpu_custom_call.1} parent=5 // pred_region
        %s256 = ssub.s32 %s22, 1
        // Predicated region
        $region13: #{tpu_custom_call.1} parent=11 // pred_check
          %p257 = pneg %p69
        $region14: #{tpu_custom_call.1} parent=11 // pred_check_branch
          %259 = sbr.rel (%p257) target = $region16
        $region15: #{tpu_custom_call.1} parent=11 // pred_region
          _
        $region16: #{tpu_custom_call.1} parent=11 // pred_fallthru
          _
        // Predicated region
        $region17: #{tpu_custom_call.1} parent=11 // pred_check
          %p260 = pneg %p90
        $region18: #{tpu_custom_call.1} parent=11 // pred_check_branch
          %262 = sbr.rel (%p260) target = $region20
        $region19: #{tpu_custom_call.1} parent=11 // pred_region
          _
        $region20: #{tpu_custom_call.1} parent=11 // pred_fallthru
          _
        // Predicated region
        $region21: #{tpu_custom_call.1} parent=11 // pred_check
          %p263 = pneg %p111
        $region22: #{tpu_custom_call.1} parent=11 // pred_check_branch
          %265 = sbr.rel (%p263) target = $region24
        $region23: #{tpu_custom_call.1} parent=11 // pred_region
          _
        $region24: #{tpu_custom_call.1} parent=11 // pred_fallthru
          _
        // Predicated region
        $region25: #{tpu_custom_call.1} parent=11 // pred_check
          %p266 = pneg %p132
        $region26: #{tpu_custom_call.1} parent=11 // pred_check_branch
          %268 = sbr.rel (%p266) target = $region28
        $region27: #{tpu_custom_call.1} parent=11 // pred_region
          _
        $region28: #{tpu_custom_call.1} parent=11 // pred_fallthru
          _
        // Predicated region
        $region29: #{tpu_custom_call.1} parent=11 // pred_check
          %p269 = pneg %p153
        $region30: #{tpu_custom_call.1} parent=11 // pred_check_branch
          %271 = sbr.rel (%p269) target = $region32
        $region31: #{tpu_custom_call.1} parent=11 // pred_region
          _
        $region32: #{tpu_custom_call.1} parent=11 // pred_fallthru
          _
        // Predicated region
        $region33: #{tpu_custom_call.1} parent=11 // pred_check
          %p272 = pneg %p174
        $region34: #{tpu_custom_call.1} parent=11 // pred_check_branch
          %274 = sbr.rel (%p272) target = $region36
        $region35: #{tpu_custom_call.1} parent=11 // pred_region
          _
        $region36: #{tpu_custom_call.1} parent=11 // pred_fallthru
          _
        // Predicated region
        $region37: #{tpu_custom_call.1} parent=11 // pred_check
          %p275 = pneg %p195
        $region38: #{tpu_custom_call.1} parent=11 // pred_check_branch
          %277 = sbr.rel (%p275) target = $region40
        $region39: #{tpu_custom_call.1} parent=11 // pred_region
          _
        $region40: #{tpu_custom_call.1} parent=11 // pred_fallthru
          _
        // Predicated region
        $region41: #{tpu_custom_call.1} parent=11 // pred_check
          %p278 = pneg %p216
        $region42: #{tpu_custom_call.1} parent=11 // pred_check_branch
          %280 = sbr.rel (%p278) target = $region44
        $region43: #{tpu_custom_call.1} parent=11 // pred_region
          _
        $region44: #{tpu_custom_call.1} parent=11 // pred_fallthru
          _
      $region12: #{tpu_custom_call.1} parent=5 // pred_fallthru
        _
      %p281 = scmp.lt.s32.totalorder %s22, 2
      // Predicated region
      $region45: #{tpu_custom_call.1} parent=5 // pred_check
        %p282 = pneg %p281
      $region46: #{tpu_custom_call.1} parent=5 // pred_check_branch
        %284 = sbr.rel (%p282) target = $region48
      $region47: #{tpu_custom_call.1} parent=5 // pred_region
        // Predicated region
        $region49: #{tpu_custom_call.1} parent=47 // pred_check
          %p285 = pneg %p42
        $region50: #{tpu_custom_call.1} parent=47 // pred_check_branch
          %287 = sbr.rel (%p285) target = $region52
        $region51: #{tpu_custom_call.1} parent=47 // pred_region
          %s288 = sand.u32 %s32, 1
          %s289 = scalar_lea.sflag [#allocation4], %s288
          %s290 = sand.u32 %s32, 1
          %s291 = smul.addr %s290, 32
          %s292 = scalar_lea.vmem [#allocation3], %s291
          %s294 = ssub.s32 512, 512
          %295 = vsyncadd %s289, %s294
          %s296 = smul.addr %s22, 4
          %s297 = smul.addr %s296, 128
          %s298 = scalar_lea.hbm %s0, %s297
          %s299 = sshll.u32 %s292, 4
          %s300 = int_to_ptr.vmem [resolvable:$true] %s299
          %305 = dma.hbm_to_vmem [thread:$0]  %s298, 512, %s300, %s289, 256, 256, 16
        $region52: #{tpu_custom_call.1} parent=47 // pred_fallthru
          _
      $region48: #{tpu_custom_call.1} parent=5 // pred_fallthru
        _
      %p306 = scmp.le.s32.totalorder 1, %s22
      %p307 = scmp.lt.s32.totalorder %s22, 3
      %p308 = pnand %p306, %p307
      %p309 = pneg %p308
      // Predicated region
      $region53: #{tpu_custom_call.1} parent=5 // pred_check
        _
      $region54: #{tpu_custom_call.1} parent=5 // pred_check_branch
        %311 = sbr.rel (%p308) target = $region56
      $region55: #{tpu_custom_call.1} parent=5 // pred_region
        %s312 = ssub.s32 %s22, 1
        %s313 = sand.u32 %s35, 1
        %s314 = scalar_lea.sflag [#allocation4], %s313
        %s315 = sand.u32 %s35, 1
        %s316 = smul.addr %s315, 32
        %s317 = scalar_lea.vmem [#allocation3], %s316
        // Predicated region
        $region57: #{tpu_custom_call.1} parent=55 // pred_check
          %p318 = pneg %p48
        $region58: #{tpu_custom_call.1} parent=55 // pred_check_branch
          %320 = sbr.rel (%p318) target = $region60
        $region59: #{tpu_custom_call.1} parent=55 // pred_region
          %321 = dma.done %s314, 512
        $region60: #{tpu_custom_call.1} parent=55 // pred_fallthru
          _
        %s322 = sand.u32 %s35, 1
        %s323 = scalar_lea.sflag [#allocation4], %s322
        %s324 = sand.u32 %s35, 1
        %s325 = smul.addr %s324, 32
        %s326 = scalar_lea.vmem [#allocation3], %s325
        %p327 = pneg %p48
        %p328 = pneg %p45
        %p329 = pneg %p69
        %p330 = pneg %p66
        %p331 = pneg %p90
        %p332 = pneg %p87
        %p333 = pneg %p111
        %p334 = pneg %p108
        %p335 = pneg %p132
        %p336 = pneg %p129
        %p337 = pneg %p153
        %p338 = pneg %p150
        %p339 = pneg %p174
        %p340 = pneg %p171
        %p341 = pneg %p195
        %p342 = pneg %p192
        %p343 = pneg %p216
        %p344 = pneg %p213
        %p345 = pneg %p242
        %p346 = pneg %p239
        %s347 = sand.u32 %s229, 1
        %s348 = scalar_lea.sflag [#allocation5], %s347
        %s349 = sand.u32 %s229, 1
        %s350 = smul.addr %s349, 32
        %s351 = scalar_lea.vmem [#allocation6], %s350
        %v352 = vld [vmem:[%s317] sm:$0xff]
        %v353 = vld [vmem:[%s317 + $0x8] sm:$0xff]
        %v354 = vld [vmem:[%s317 + $0x10] sm:$0xff]
        %v355 = vld [vmem:[%s317 + $0x18] sm:$0xff]
        %v356 = vld [vmem:[%s1] sm:$0x1]
        %v357 = vcombine.high %v352, 0.0
        %v359 = vunpack.c.l.s4 1983009808
        %v360 = vunpack.c.0.s8 %v359
        %v361 = vlaneseq
        %v362 = vshrl.u32 %v361, 7
        %v363 = vsub.s32 %v360, %v362
        %v364 = vrot.slane %v352, %v363
        %v366 = vunpack.c.l.s4 1983009808
        %v367 = vunpack.c.0.s8 %v366
        %v368 = vlaneseq
        %v369 = vshrl.u32 %v368, 7
        %v370 = vsub.s32 %v367, %v369
        %v371 = vrot.slane %v357, %v370
        %v372 = vcombine.high %v364, 0.0
        %v374 = vunpack.c.l.s4 1934713408
        %v375 = vunpack.c.0.s8 %v374
        %v376 = vlaneseq
        %v377 = vshrl.u32 %v376, 7
        %v378 = vsub.s32 %v375, %v377
        %v379 = vrot.slane %v364, %v378
        %v381 = vunpack.c.l.s4 1934713408
        %v382 = vunpack.c.0.s8 %v381
        %v383 = vlaneseq
        %v384 = vshrl.u32 %v383, 7
        %v385 = vsub.s32 %v382, %v384
        %v386 = vrot.slane %v372, %v385
        %v387 = vcombine.high %v371, 0.0
        %v389 = vunpack.c.l.s4 1934713408
        %v390 = vunpack.c.0.s8 %v389
        %v391 = vlaneseq
        %v392 = vshrl.u32 %v391, 7
        %v393 = vsub.s32 %v390, %v392
        %v394 = vrot.slane %v371, %v393
        %v396 = vunpack.c.l.s4 1934713408
        %v397 = vunpack.c.0.s8 %v396
        %v398 = vlaneseq
        %v399 = vshrl.u32 %v398, 7
        %v400 = vsub.s32 %v397, %v399
        %v401 = vrot.slane %v387, %v400
        %v402 = vcombine.high %v379, 0.0
        %v403 = vcombine.high %v386, 0.0
        %v404 = vcombine.high %v394, 0.0
        %v405 = vcombine.high %v401, 0.0
        %v406 = vcombine.high %v354, 0.0
        %v408 = vunpack.c.l.s4 1983009808
        %v409 = vunpack.c.0.s8 %v408
        %v410 = vlaneseq
        %v411 = vshrl.u32 %v410, 7
        %v412 = vsub.s32 %v409, %v411
        %v413 = vrot.slane %v354, %v412
        %v415 = vunpack.c.l.s4 1983009808
        %v416 = vunpack.c.0.s8 %v415
        %v417 = vlaneseq
        %v418 = vshrl.u32 %v417, 7
        %v419 = vsub.s32 %v416, %v418
        %v420 = vrot.slane %v406, %v419
        %v421 = vcombine.high %v413, 0.0
        %v423 = vunpack.c.l.s4 1934713408
        %v424 = vunpack.c.0.s8 %v423
        %v425 = vlaneseq
        %v426 = vshrl.u32 %v425, 7
        %v427 = vsub.s32 %v424, %v426
        %v428 = vrot.slane %v413, %v427
        %v430 = vunpack.c.l.s4 1934713408
        %v431 = vunpack.c.0.s8 %v430
        %v432 = vlaneseq
        %v433 = vshrl.u32 %v432, 7
        %v434 = vsub.s32 %v431, %v433
        %v435 = vrot.slane %v421, %v434
        %v436 = vcombine.high %v420, 0.0
        %v438 = vunpack.c.l.s4 1934713408
        %v439 = vunpack.c.0.s8 %v438
        %v440 = vlaneseq
        %v441 = vshrl.u32 %v440, 7
        %v442 = vsub.s32 %v439, %v441
        %v443 = vrot.slane %v420, %v442
        %v445 = vunpack.c.l.s4 1934713408
        %v446 = vunpack.c.0.s8 %v445
        %v447 = vlaneseq
        %v448 = vshrl.u32 %v447, 7
        %v449 = vsub.s32 %v446, %v448
        %v450 = vrot.slane %v436, %v449
        %v451 = vcombine.high %v428, 0.0
        %v452 = vcombine.high %v435, 0.0
        %v453 = vcombine.high %v443, 0.0
        %v454 = vcombine.high %v450, 0.0
        %v455 = vcombine.high %v353, 0.0
        %v457 = vunpack.c.l.s4 1983009808
        %v458 = vunpack.c.0.s8 %v457
        %v459 = vlaneseq
        %v460 = vshrl.u32 %v459, 7
        %v461 = vsub.s32 %v458, %v460
        %v462 = vrot.slane %v353, %v461
        %v464 = vunpack.c.l.s4 1983009808
        %v465 = vunpack.c.0.s8 %v464
        %v466 = vlaneseq
        %v467 = vshrl.u32 %v466, 7
        %v468 = vsub.s32 %v465, %v467
        %v469 = vrot.slane %v455, %v468
        %v470 = vcombine.high %v462, 0.0
        %v472 = vunpack.c.l.s4 1934713408
        %v473 = vunpack.c.0.s8 %v472
        %v474 = vlaneseq
        %v475 = vshrl.u32 %v474, 7
        %v476 = vsub.s32 %v473, %v475
        %v477 = vrot.slane %v462, %v476
        %v479 = vunpack.c.l.s4 1934713408
        %v480 = vunpack.c.0.s8 %v479
        %v481 = vlaneseq
        %v482 = vshrl.u32 %v481, 7
        %v483 = vsub.s32 %v480, %v482
        %v484 = vrot.slane %v470, %v483
        %v485 = vcombine.high %v469, 0.0
        %v487 = vunpack.c.l.s4 1934713408
        %v488 = vunpack.c.0.s8 %v487
        %v489 = vlaneseq
        %v490 = vshrl.u32 %v489, 7
        %v491 = vsub.s32 %v488, %v490
        %v492 = vrot.slane %v469, %v491
        %v494 = vunpack.c.l.s4 1934713408
        %v495 = vunpack.c.0.s8 %v494
        %v496 = vlaneseq
        %v497 = vshrl.u32 %v496, 7
        %v498 = vsub.s32 %v495, %v497
        %v499 = vrot.slane %v485, %v498
        %v500 = vcombine.high %v477, 0.0
        %v501 = vcombine.high %v484, 0.0
        %v502 = vcombine.high %v492, 0.0
        %v503 = vcombine.high %v499, 0.0
        %v504 = vcombine.high %v355, 0.0
        %v506 = vunpack.c.l.s4 1983009808
        %v507 = vunpack.c.0.s8 %v506
        %v508 = vlaneseq
        %v509 = vshrl.u32 %v508, 7
        %v510 = vsub.s32 %v507, %v509
        %v511 = vrot.slane %v355, %v510
        %v513 = vunpack.c.l.s4 1983009808
        %v514 = vunpack.c.0.s8 %v513
        %v515 = vlaneseq
        %v516 = vshrl.u32 %v515, 7
        %v517 = vsub.s32 %v514, %v516
        %v518 = vrot.slane %v504, %v517
        %v519 = vcombine.high %v511, 0.0
        %v521 = vunpack.c.l.s4 1934713408
        %v522 = vunpack.c.0.s8 %v521
        %v523 = vlaneseq
        %v524 = vshrl.u32 %v523, 7
        %v525 = vsub.s32 %v522, %v524
        %v526 = vrot.slane %v511, %v525
        %v528 = vunpack.c.l.s4 1934713408
        %v529 = vunpack.c.0.s8 %v528
        %v530 = vlaneseq
        %v531 = vshrl.u32 %v530, 7
        %v532 = vsub.s32 %v529, %v531
        %v533 = vrot.slane %v519, %v532
        %v534 = vcombine.high %v518, 0.0
        %v536 = vunpack.c.l.s4 1934713408
        %v537 = vunpack.c.0.s8 %v536
        %v538 = vlaneseq
        %v539 = vshrl.u32 %v538, 7
        %v540 = vsub.s32 %v537, %v539
        %v541 = vrot.slane %v518, %v540
        %v543 = vunpack.c.l.s4 1934713408
        %v544 = vunpack.c.0.s8 %v543
        %v545 = vlaneseq
        %v546 = vshrl.u32 %v545, 7
        %v547 = vsub.s32 %v544, %v546
        %v548 = vrot.slane %v534, %v547
        %v549 = vcombine.high %v526, 0.0
        %v550 = vcombine.high %v533, 0.0
        %v551 = vcombine.high %v541, 0.0
        %v552 = vcombine.high %v548, 0.0
        %s553 = sld [smem:[#allocation2]]
        %v554 = vstv %s553
        %v587 = vrot.slane %v402, 7
        %vm588 = vcmask 1041409
        %v589 = vsel %vm588, %v587, %v379
        %v590 = vrot.slane %v386, 6
        %vm591 = vcmask 1042434
        %v592 = vsel %vm591, %v590, %v589
        %v593 = vrot.slane %v403, 5
        %vm594 = vcmask 1043459
        %v595 = vsel %vm594, %v593, %v592
        %v596 = vrot.slane %v394, 4
        %vm597 = vcmask 1044484
        %v598 = vsel %vm597, %v596, %v595
        %v599 = vrot.slane %v404, 3
        %vm600 = vcmask 1045509
        %v601 = vsel %vm600, %v599, %v598
        %v602 = vrot.slane %v401, 2
        %vm603 = vcmask 1046534
        %v604 = vsel %vm603, %v602, %v601
        %v605 = vrot.slane %v405, 1
        %vm606 = vcmask 1047559
        %v607 = vsel %vm606, %v605, %v604
        %v608 = vrot.slane %v500, 7
        %v609 = vsel %vm588, %v608, %v477
        %v610 = vrot.slane %v484, 6
        %v611 = vsel %vm591, %v610, %v609
        %v612 = vrot.slane %v501, 5
        %v613 = vsel %vm594, %v612, %v611
        %v614 = vrot.slane %v492, 4
        %v615 = vsel %vm597, %v614, %v613
        %v616 = vrot.slane %v502, 3
        %v617 = vsel %vm600, %v616, %v615
        %v618 = vrot.slane %v499, 2
        %v619 = vsel %vm603, %v618, %v617
        %v620 = vrot.slane %v503, 1
        %v621 = vsel %vm606, %v620, %v619
        %v622 = vrot.slane %v451, 7
        %v623 = vsel %vm588, %v622, %v428
        %v624 = vrot.slane %v435, 6
        %v625 = vsel %vm591, %v624, %v623
        %v626 = vrot.slane %v452, 5
        %v627 = vsel %vm594, %v626, %v625
        %v628 = vrot.slane %v443, 4
        %v629 = vsel %vm597, %v628, %v627
        %v630 = vrot.slane %v453, 3
        %v631 = vsel %vm600, %v630, %v629
        %v632 = vrot.slane %v450, 2
        %v633 = vsel %vm603, %v632, %v631
        %v634 = vrot.slane %v454, 1
        %v635 = vsel %vm606, %v634, %v633
        %v636 = vrot.slane %v549, 7
        %v637 = vsel %vm588, %v636, %v526
        %v638 = vrot.slane %v533, 6
        %v639 = vsel %vm591, %v638, %v637
        %v640 = vrot.slane %v550, 5
        %v641 = vsel %vm594, %v640, %v639
        %v642 = vrot.slane %v541, 4
        %v643 = vsel %vm597, %v642, %v641
        %v644 = vrot.slane %v551, 3
        %v645 = vsel %vm600, %v644, %v643
        %v646 = vrot.slane %v548, 2
        %v647 = vsel %vm603, %v646, %v645
        %v648 = vrot.slane %v552, 1
        %v649 = vsel %vm606, %v648, %v647
        %vm654 = vcmask 130048
        %v656 = vsel %vm654, %v356, 0
        %658 = vmatprep.subr.mxu0 0.0
        %659 = vmatpush1.msra.mxu0 0.0
        %660 = vmatprep.subr.mxu0 0.0
        %661 = vmatpush1.msra.mxu0 0.0
        %662 = vmatprep.subr.mxu0 0.0
        %663 = vmatpush1.msra.mxu0 0.0
        %664 = vmatprep.subr.mxu0 0.0
        %665 = vmatpush1.msra.mxu0 0.0
        %666 = vmatprep.subr.mxu0 0.0
        %667 = vmatpush1.msra.mxu0 0.0
        %668 = vmatprep.subr.mxu0 0.0
        %669 = vmatpush1.msra.mxu0 0.0
        %670 = vmatprep.subr.mxu0 0.0
        %671 = vmatpush1.msra.mxu0 0.0
        %672 = vmatprep.subr.mxu0 0.0
        %673 = vmatpush1.msra.mxu0 0.0
        %674 = vmatprep.subr.mxu0 0.0
        %675 = vmatpush1.msra.mxu0 0.0
        %676 = vmatprep.subr.mxu0 0.0
        %677 = vmatpush1.msra.mxu0 0.0
        %678 = vmatprep.subr.mxu0 0.0
        %679 = vmatpush1.msra.mxu0 0.0
        %680 = vmatprep.subr.mxu0 0.0
        %681 = vmatpush1.msra.mxu0 0.0
        %682 = vmatprep.subr.mxu0 0.0
        %683 = vmatpush1.msra.mxu0 0.0
        %684 = vmatprep.subr.mxu0 0.0
        %685 = vmatpush1.msra.mxu0 0.0
        %686 = vmatprep.subr.mxu0 %v649
        %687 = vmatpush1.msra.mxu0 %v635
        %688 = vmatprep.subr.mxu0 %v621
        %689 = vmatpush1.msra.mxu0 %v607
        %690 = vmatprep.subr.mxu0 0.0
        %691 = vmatpush2.msra.mxu0 0.0
        %692 = vmatprep.subr.mxu0 0.0
        %693 = vmatpush2.msra.mxu0 0.0
        %694 = vmatprep.subr.mxu0 0.0
        %695 = vmatpush2.msra.mxu0 0.0
        %696 = vmatprep.subr.mxu0 0.0
        %697 = vmatpush2.msra.mxu0 0.0
        %698 = vmatprep.subr.mxu0 0.0
        %699 = vmatpush2.msra.mxu0 0.0
        %700 = vmatprep.subr.mxu0 0.0
        %701 = vmatpush2.msra.mxu0 0.0
        %702 = vmatprep.subr.mxu0 0.0
        %703 = vmatpush2.msra.mxu0 0.0
        %704 = vmatprep.subr.mxu0 0.0
        %705 = vmatpush2.msra.mxu0 0.0
        %706 = vmatprep.subr.mxu0 0.0
        %707 = vmatpush2.msra.mxu0 0.0
        %708 = vmatprep.subr.mxu0 0.0
        %709 = vmatpush2.msra.mxu0 0.0
        %710 = vmatprep.subr.mxu0 0.0
        %711 = vmatpush2.msra.mxu0 0.0
        %712 = vmatprep.subr.mxu0 0.0
        %713 = vmatpush2.msra.mxu0 0.0
        %714 = vmatprep.subr.mxu0 0.0
        %715 = vmatpush2.msra.mxu0 0.0
        %716 = vmatprep.subr.mxu0 0.0
        %717 = vmatpush2.msra.mxu0 0.0
        %718 = vmatprep.subr.mxu0 0.0
        %719 = vmatpush2.msra.mxu0 0.0
        %720 = vmatprep.subr.mxu0 0.0
        %721 = vmatpush2.msra.mxu0 0.0
        %722 = vmatprep.mubr.f32.mxu0 0.0
        %723 = vmatmul.mubr.f32.gmra.mxu0 %v656
        %v724 = vpop.f32.mrf.mxu0
        %v725 = vadd.f32 %v554, %v724
        %v726 = vpop.f32.mrf.mxu0
        %v727 = vadd.f32 %v554, %v726
        %728 = vdwg.mxu0
        %vm729 = vcmask 1040384
        %v730 = vsel %vm729, %v725, -inf
        %v731 = vsel %vm729, %v727, -inf
        %v732 = vmax.f32 %v730, %v731
        %733 = vmax.xlane.f32.xlu0 %v732
        %v734 = vpop.xlane.xlu0 %733
        %v735 = vsub.f32 %v725, %v734
        %v736 = vsub.f32 %v727, %v734
        %v737 = vmul.f32 %v735, 1.442695
        %v738 = vpow.pop %v737
        %v739 = vmul.f32 %v736, 1.442695
        %v740 = vpow.pop %v739
        %v741 = vsel %vm729, %v738, 0.0
        %v742 = vsel %vm729, %v740, 0.0
        %v743 = vadd.f32 %v741, %v742
        %744 = vadd.xlane.f32.xlu0 %v743
        %v745 = vpop.xlane.xlu0 %744
        %v746 = vrcp.pop %v745
        %v747 = vmul.f32 %v745, %v746
        %v748 = vsub.f32 2.0, %v747
        %v749 = vmul.f32 %v746, %v748
        %v750 = vmul.f32 %v738, %v749
        %v751 = vmul.f32 %v740, %v749
        %v752 = vlaneseq
        %v753 = vshrl.u32 %v752, 7
        %v754 = vsub.s32 0, %v753
        %v755 = vrot.slane %v750, %v754
        %v756 = vlaneseq
        %v757 = vshrl.u32 %v756, 7
        %v758 = vsub.s32 0, %v757
        %v759 = vrot.slane %v751, %v758
        %v760 = vmul.f32 %v352, %v755
        %v761 = vmul.f32 %v353, %v759
        %v762 = vmul.f32 %v354, %v755
        %v763 = vmul.f32 %v355, %v759
        %v764 = vadd.f32 %v760, %v761
        %765 = vadd.xlane.f32.xlu0 %v764
        %v766 = vpop.xlane.xlu0 %765
        %v767 = vadd.f32 %v762, %v763
        %768 = vadd.xlane.f32.xlu0 %v767
        %v769 = vpop.xlane.xlu0 %768
        %v770 = vld [vmem:[%s3] sm:$0xff]
        %v771 = vld [vmem:[%s3 + $0x8] sm:$0xff]
        %v772 = vld [vmem:[%s4] sm:$0x1]
        %v775 = vlaneseq
        %v776 = vand.u32 %v775, 127
        %v777 = vlaneseq
        %v778 = vshrl.u32 %v777, 7
        %v779 = vsub.s32 %v776, %v778
        %v780 = vrot.slane %v766, %v779
        %v781 = vadd.s32 %v776, 4294967288
        %v782 = vlaneseq
        %v783 = vshrl.u32 %v782, 7
        %v784 = vsub.s32 %v781, %v783
        %v785 = vrot.slane %v769, %v784
        %vm786 = vcmask 130112
        %v787 = vsel %vm786, %v785, %v780
        %v788 = vsel %vm654, %v787, 0
        %790 = vmatprep.subr.mxu0 0.0
        %791 = vmatpush1.msra.mxu0 0.0
        %792 = vmatprep.subr.mxu0 0.0
        %793 = vmatpush1.msra.mxu0 0.0
        %794 = vmatprep.subr.mxu0 0.0
        %795 = vmatpush1.msra.mxu0 0.0
        %796 = vmatprep.subr.mxu0 0.0
        %797 = vmatpush1.msra.mxu0 0.0
        %798 = vmatprep.subr.mxu0 0.0
        %799 = vmatpush1.msra.mxu0 0.0
        %800 = vmatprep.subr.mxu0 0.0
        %801 = vmatpush1.msra.mxu0 0.0
        %802 = vmatprep.subr.mxu0 0.0
        %803 = vmatpush1.msra.mxu0 0.0
        %804 = vmatprep.subr.mxu0 0.0
        %805 = vmatpush1.msra.mxu0 0.0
        %806 = vmatprep.subr.mxu0 0.0
        %807 = vmatpush1.msra.mxu0 0.0
        %808 = vmatprep.subr.mxu0 0.0
        %809 = vmatpush1.msra.mxu0 0.0
        %810 = vmatprep.subr.mxu0 0.0
        %811 = vmatpush1.msra.mxu0 0.0
        %812 = vmatprep.subr.mxu0 0.0
        %813 = vmatpush1.msra.mxu0 0.0
        %814 = vmatprep.subr.mxu0 0.0
        %815 = vmatpush1.msra.mxu0 0.0
        %816 = vmatprep.subr.mxu0 0.0
        %817 = vmatpush1.msra.mxu0 0.0
        %818 = vmatprep.subr.mxu0 0.0
        %819 = vmatpush1.msra.mxu0 %v771
        %820 = vmatprep.subr.mxu0 0.0
        %821 = vmatpush1.msra.mxu0 %v770
        %822 = vmatprep.subr.mxu0 0.0
        %823 = vmatpush2.msra.mxu0 0.0
        %824 = vmatprep.subr.mxu0 0.0
        %825 = vmatpush2.msra.mxu0 0.0
        %826 = vmatprep.subr.mxu0 0.0
        %827 = vmatpush2.msra.mxu0 0.0
        %828 = vmatprep.subr.mxu0 0.0
        %829 = vmatpush2.msra.mxu0 0.0
        %830 = vmatprep.subr.mxu0 0.0
        %831 = vmatpush2.msra.mxu0 0.0
        %832 = vmatprep.subr.mxu0 0.0
        %833 = vmatpush2.msra.mxu0 0.0
        %834 = vmatprep.subr.mxu0 0.0
        %835 = vmatpush2.msra.mxu0 0.0
        %836 = vmatprep.subr.mxu0 0.0
        %837 = vmatpush2.msra.mxu0 0.0
        %838 = vmatprep.subr.mxu0 0.0
        %839 = vmatpush2.msra.mxu0 0.0
        %840 = vmatprep.subr.mxu0 0.0
        %841 = vmatpush2.msra.mxu0 0.0
        %842 = vmatprep.subr.mxu0 0.0
        %843 = vmatpush2.msra.mxu0 0.0
        %844 = vmatprep.subr.mxu0 0.0
        %845 = vmatpush2.msra.mxu0 0.0
        %846 = vmatprep.subr.mxu0 0.0
        %847 = vmatpush2.msra.mxu0 0.0
        %848 = vmatprep.subr.mxu0 0.0
        %849 = vmatpush2.msra.mxu0 0.0
        %850 = vmatprep.subr.mxu0 0.0
        %851 = vmatpush2.msra.mxu0 0.0
        %852 = vmatprep.subr.mxu0 0.0
        %853 = vmatpush2.msra.mxu0 0.0
        %854 = vmatprep.mubr.f32.mxu0 0.0
        %855 = vmatmul.mubr.f32.gmra.mxu0 %v788
        %v856 = vpop.f32.mrf.mxu0
        %v857 = vadd.f32 %v772, %v856
        %v858 = vpop.f32.mrf.mxu0
        %859 = vdwg.mxu0
        %vm860 = vcmask 24576
        %v861 = vsel %vm860, %v857, 0.0
        %862 = vadd.xlane.f32.xlu0 %v861
        %v863 = vpop.xlane.xlu0 %862
        %v864 = vrcp.pop 4.0
        %v865 = vmul.f32 %v863, %v864
        %v866 = vsub.f32 %v857, %v865
        %v867 = vmul.f32 %v866, %v866
        %v868 = vsel %vm860, %v867, 0.0
        %869 = vadd.xlane.f32.xlu0 %v868
        %v870 = vpop.xlane.xlu0 %869
        %v871 = vmul.f32 %v870, %v864
        %v872 = vadd.f32 %v871, 1e-05
        %v873 = vrsqrt.pop %v872
        %v874 = vmul.f32 %v866, %v873
        %v875 = vld [vmem:[%s5] sm:$0x1]
        %v876 = vmul.f32 %v874, %v875
        %v877 = vld [vmem:[%s6] sm:$0x1]
        %v878 = vadd.f32 %v876, %v877
        %v879 = vmax.f32 %v878, 0.0
        %v880 = vld [vmem:[%s7] sm:$0xf]
        %v881 = vld [vmem:[%s8] sm:$0x1]
        %vm882 = vcmask 31744
        %v884 = vsel %vm882, %v879, 0
        %vm886 = vcmask 1043456
        %v888 = vsel %vm886, %v880, 0
        %890 = vmatprep.subr.mxu0 0.0
        %891 = vmatpush1.msra.mxu0 0.0
        %892 = vmatprep.subr.mxu0 0.0
        %893 = vmatpush1.msra.mxu0 0.0
        %894 = vmatprep.subr.mxu0 0.0
        %895 = vmatpush1.msra.mxu0 0.0
        %896 = vmatprep.subr.mxu0 0.0
        %897 = vmatpush1.msra.mxu0 0.0
        %898 = vmatprep.subr.mxu0 0.0
        %899 = vmatpush1.msra.mxu0 0.0
        %900 = vmatprep.subr.mxu0 0.0
        %901 = vmatpush1.msra.mxu0 0.0
        %902 = vmatprep.subr.mxu0 0.0
        %903 = vmatpush1.msra.mxu0 0.0
        %904 = vmatprep.subr.mxu0 0.0
        %905 = vmatpush1.msra.mxu0 0.0
        %906 = vmatprep.subr.mxu0 0.0
        %907 = vmatpush1.msra.mxu0 0.0
        %908 = vmatprep.subr.mxu0 0.0
        %909 = vmatpush1.msra.mxu0 0.0
        %910 = vmatprep.subr.mxu0 0.0
        %911 = vmatpush1.msra.mxu0 0.0
        %912 = vmatprep.subr.mxu0 0.0
        %913 = vmatpush1.msra.mxu0 0.0
        %914 = vmatprep.subr.mxu0 0.0
        %915 = vmatpush1.msra.mxu0 0.0
        %916 = vmatprep.subr.mxu0 0.0
        %917 = vmatpush1.msra.mxu0 0.0
        %918 = vmatprep.subr.mxu0 0.0
        %919 = vmatpush1.msra.mxu0 0.0
        %920 = vmatprep.subr.mxu0 0.0
        %921 = vmatpush1.msra.mxu0 %v888
        %922 = vmatprep.subr.mxu0 0.0
        %923 = vmatpush2.msra.mxu0 0.0
        %924 = vmatprep.subr.mxu0 0.0
        %925 = vmatpush2.msra.mxu0 0.0
        %926 = vmatprep.subr.mxu0 0.0
        %927 = vmatpush2.msra.mxu0 0.0
        %928 = vmatprep.subr.mxu0 0.0
        %929 = vmatpush2.msra.mxu0 0.0
        %930 = vmatprep.subr.mxu0 0.0
        %931 = vmatpush2.msra.mxu0 0.0
        %932 = vmatprep.subr.mxu0 0.0
        %933 = vmatpush2.msra.mxu0 0.0
        %934 = vmatprep.subr.mxu0 0.0
        %935 = vmatpush2.msra.mxu0 0.0
        %936 = vmatprep.subr.mxu0 0.0
        %937 = vmatpush2.msra.mxu0 0.0
        %938 = vmatprep.subr.mxu0 0.0
        %939 = vmatpush2.msra.mxu0 0.0
        %940 = vmatprep.subr.mxu0 0.0
        %941 = vmatpush2.msra.mxu0 0.0
        %942 = vmatprep.subr.mxu0 0.0
        %943 = vmatpush2.msra.mxu0 0.0
        %944 = vmatprep.subr.mxu0 0.0
        %945 = vmatpush2.msra.mxu0 0.0
        %946 = vmatprep.subr.mxu0 0.0
        %947 = vmatpush2.msra.mxu0 0.0
        %948 = vmatprep.subr.mxu0 0.0
        %949 = vmatpush2.msra.mxu0 0.0
        %950 = vmatprep.subr.mxu0 0.0
        %951 = vmatpush2.msra.mxu0 0.0
        %952 = vmatprep.subr.mxu0 0.0
        %953 = vmatpush2.msra.mxu0 0.0
        %954 = vmatprep.mubr.f32.mxu0 0.0
        %955 = vmatmul.mubr.f32.gmra.mxu0 %v884
        %v956 = vpop.f32.mrf.mxu0
        %v957 = vadd.f32 %v881, %v956
        %v958 = vpop.f32.mrf.mxu0
        %959 = vdwg.mxu0
        %v960 = vlaneseq
        %v961 = vshrl.u32 %v960, 7
        %v962 = vsub.s32 0, %v961
        %v963 = vrot.slane %v957, %v962
        %965 = vbcast.lane.b32.xlu0 %v963, 256
        %v966 = vpop.permute.xlu0 %965
        %s968 = sor.u32 256, 8
        %969 = vbcast.lane.b32.xlu0 %v963, %s968
        %v970 = vpop.permute.xlu0 %969
        %v971 = vadd.f32 %v352, %v966
        %v972 = vadd.f32 %v353, %v966
        %v973 = vadd.f32 %v354, %v970
        %v974 = vadd.f32 %v355, %v970
        %975 = vst [vmem:[%s351] sm:$0xff] %v971
        %976 = vst [vmem:[%s351 + $0x8] sm:$0xff] %v972
        %977 = vst [vmem:[%s351 + $0x10] sm:$0xff] %v973
        %978 = vst [vmem:[%s351 + $0x18] sm:$0xff] %v974
        %s979 = sand.u32 %s229, 1
        %s980 = scalar_lea.sflag [#allocation5], %s979
        %s981 = sand.u32 %s229, 1
        %s982 = smul.addr %s981, 32
        %s983 = scalar_lea.vmem [#allocation6], %s982
        // Predicated region
        $region61: #{tpu_custom_call.1} parent=55 // pred_check
          %p984 = pneg %p239
        $region62: #{tpu_custom_call.1} parent=55 // pred_check_branch
          %986 = sbr.rel (%p984) target = $region64
        $region63: #{tpu_custom_call.1} parent=55 // pred_region
          %s988 = ssub.s32 512, 512
          %989 = vsyncadd %s980, %s988
          %s990 = smul.addr %s27, 4
          %s991 = smul.addr %s990, 128
          %s992 = scalar_lea.hbm %s9, %s991
          %s993 = sshll.u32 %s983, 4
          %s994 = int_to_ptr.vmem [resolvable:$true] %s993
          %999 = dma.vmem_to_hbm [thread:$0]  %s994, 512, %s992, %s980, 256, 256, 16
        $region64: #{tpu_custom_call.1} parent=55 // pred_fallthru
          _
      $region56: #{tpu_custom_call.1} parent=5 // pred_fallthru
        _
      %p1000 = scmp.le.s32.totalorder 2, %s22
      // Predicated region
      $region65: #{tpu_custom_call.1} parent=5 // pred_check
        %p1001 = pneg %p1000
      $region66: #{tpu_custom_call.1} parent=5 // pred_check_branch
        %1003 = sbr.rel (%p1001) target = $region68
      $region67: #{tpu_custom_call.1} parent=5 // pred_region
        %s1004 = ssub.s32 %s22, 2
        // Predicated region
        $region69: #{tpu_custom_call.1} parent=67 // pred_check
          %p1005 = pneg %p245
        $region70: #{tpu_custom_call.1} parent=67 // pred_check_branch
          %1007 = sbr.rel (%p1005) target = $region72
        $region71: #{tpu_custom_call.1} parent=67 // pred_region
          %s1008 = sand.u32 %s230, 1
          %s1009 = scalar_lea.sflag [#allocation5], %s1008
          %s1010 = sand.u32 %s230, 1
          %s1011 = smul.addr %s1010, 32
          %s1012 = scalar_lea.vmem [#allocation6], %s1011
          %1013 = dma.done %s1009, 512
        $region72: #{tpu_custom_call.1} parent=67 // pred_fallthru
          _
      $region68: #{tpu_custom_call.1} parent=5 // pred_fallthru
        _
    $region6: #{tpu_custom_call.1} parent=1 // loop_footer
      %s26 = sadd.s32 1, %s22
    $region7: #{tpu_custom_call.1} parent=1 // loop_footer_branch
      %21 = sbr.rel target = $region3
    $region8: #{tpu_custom_call.1} parent=1 // loop_exit
      _
    %1014 = vsyncpa [#allocation4], 1
    %s1015 = scalar_lea.sflag [#allocation4], 1
    %1016 = vsyncpa %s1015, 1
    %1017 = vsyncpa [#allocation5], 1
    %s1018 = scalar_lea.sflag [#allocation5], 1
    %1019 = vsyncpa %s1018, 1

</llo_original>
